<compile_context>
chip_gen: v5e
topology: v5e:2x2
jax: 0.10.0
libtpu: 0.0.40
codegen_flags: <defaults>
</compile_context>

<pallas_src>
import functools

import jax
import jax.numpy as jnp
from jax.experimental import pallas as pl
from jax.experimental.pallas import tpu as pltpu


# --------------------------- fused forward kernel -----------------------------
def _fused_lstm_fc_kernel(x_ref, wih_ref, whh_ref, b_ref, wfc_ref, bfc_ref,
                          out_ref, *, seq_len, batch_p, hidden, classes_p):
    """Fused: input-proj -> unrolled LSTM over time -> FC -> log_softmax.

    x_ref   : (T, Bp, E)  bf16 time-major embedded tokens
    wih_ref : (E, 4H)     bf16 (pre-transposed W_ih)
    whh_ref : (H, 4H)     bf16 (pre-transposed W_hh)
    b_ref   : (1, 4H)     f32  (b_ih + b_hh)
    wfc_ref : (H, Cp)     bf16 (pre-transposed, class-padded FC weight)
    bfc_ref : (1, Cp)     f32  (FC bias; padded classes = -1e9)
    out_ref : (T, Bp, Cp) f32  time-major log-probabilities
    """
    T, Bp, H, Cp = seq_len, batch_p, hidden, classes_p
    E = x_ref.shape[-1]

    # ---- hoisted input projection: one big MXU matmul + bias ------------------
    x_flat = x_ref[...].reshape(T * Bp, E)                          # bf16, time-major
    xproj = jnp.dot(x_flat, wih_ref[...],
                    preferred_element_type=jnp.float32) + b_ref[...]  # (T*Bp, 4H) f32

    whh = whh_ref[...]                                              # (H, 4H) bf16

    # ---- serial recurrence (statically unrolled; T small) ---------------------
    h = jnp.zeros((Bp, H), jnp.float32)
    c = jnp.zeros((Bp, H), jnp.float32)
    hs = []
    for t in range(T):
        gates = xproj[t * Bp:(t + 1) * Bp, :] + jnp.dot(
            h.astype(whh.dtype), whh, preferred_element_type=jnp.float32)  # (Bp, 4H)
        # PyTorch LSTM gate order: i, f, g, o  (elementwise math kept in f32)
        i = jax.nn.sigmoid(gates[:, 0 * H:1 * H])
        f = jax.nn.sigmoid(gates[:, 1 * H:2 * H])
        g = jnp.tanh(gates[:, 2 * H:3 * H])
        o = jax.nn.sigmoid(gates[:, 3 * H:4 * H])
        c = f * c + i * g
        h = o * jnp.tanh(c)
        hs.append(h)

    # ---- FC + log_softmax on all timesteps at once -----------------------------
    h_all = jnp.concatenate(hs, axis=0)                             # (T*Bp, H) time-major
    logits = jnp.dot(h_all.astype(wfc_ref.dtype), wfc_ref[...],
                     preferred_element_type=jnp.float32) + bfc_ref[...]   # (T*Bp, Cp)
    m = jnp.max(logits, axis=-1, keepdims=True)
    shifted = logits - m
    logp = shifted - jnp.log(jnp.sum(jnp.exp(shifted), axis=-1, keepdims=True))

    # single dense, lane-aligned store (time-major; wrapper transposes to batch-first)
    out_ref[...] = logp.reshape(T, Bp, Cp)


# ------------------------------- model wrapper ---------------------------------
def _round_up(n, m):
    return ((n + m - 1) // m) * m


def model_forward(token_ids, labels, params):
    """Replicates Model.forward (glove + lstm path) semantics.

    token_ids : (B, T) int32 word ids (the glove word2id/pad_sequences glue is
                replaced by a deterministic id tensor built in-script).
    Returns (log_probs, labels) with log_probs of shape (B*T, num_of_tags).
    """
    emb_table = params["embedding"]          # (V, E) f32
    w_ih = params["w_ih"]                    # (4H, E)
    w_hh = params["w_hh"]                    # (4H, H)
    b_comb = params["b_comb"]                # (1, 4H)  == b_ih + b_hh
    w_fc = params["w_fc"]                    # (C, H)
    b_fc = params["b_fc"]                    # (1, C)

    B, T = token_ids.shape
    E = emb_table.shape[1]
    H = w_hh.shape[1]
    C = w_fc.shape[0]
    Bp = _round_up(B, 8)                     # sublane-dense batch tile
    Cp = _round_up(C, 128)                   # lane-dense class tile

    # glue: embedding gather, time-major, batch padded with token-id 0 rows
    ids_p = jnp.zeros((Bp, T), token_ids.dtype).at[:B, :].set(token_ids)
    x_tm = jnp.take(emb_table, ids_p.T, axis=0).astype(jnp.bfloat16)      # (T, Bp, E)

    # pre-transposed / padded / bf16-cast weights (MXU operands bf16, f32 accum)
    wih_t = w_ih.T.astype(jnp.bfloat16)                                   # (E, 4H)
    whh_t = w_hh.T.astype(jnp.bfloat16)                                   # (H, 4H)
    wfc_t = jnp.zeros((H, Cp), jnp.float32).at[:, :C].set(w_fc.T).astype(jnp.bfloat16)
    bfc_p = jnp.full((1, Cp), -1e9, jnp.float32).at[:, :C].set(b_fc)

    out_tm = pl.pallas_call(
        functools.partial(_fused_lstm_fc_kernel, seq_len=T, batch_p=Bp,
                          hidden=H, classes_p=Cp),
        out_shape=jax.ShapeDtypeStruct((T, Bp, Cp), jnp.float32),
        in_specs=[pl.BlockSpec(memory_space=pltpu.MemorySpace.VMEM)] * 6,
        out_specs=pl.BlockSpec(memory_space=pltpu.MemorySpace.VMEM),
    )(x_tm, wih_t, whh_t, b_comb.astype(jnp.float32), wfc_t, bfc_p)

    # TODO(synk): nn.Dropout is identity in eval mode; training-mode dropout not applied.
    # wrapper-side layout plumbing: time-major -> batch-first (matches x.view(-1, hidden))
    log_probs = jnp.transpose(out_tm, (1, 0, 2))[:B, :, :C].reshape(B * T, C)
    return log_probs, labels


# --------------------------- pure-JAX f32 reference -----------------------------
def _reference_forward(token_ids, params):
    x = jnp.take(params["embedding"], token_ids, axis=0)                  # (B, T, E)
    w_ih, w_hh, b = params["w_ih"], params["w_hh"], params["b_comb"]
    H = w_hh.shape[1]
    B = x.shape[0]

    def step(carry, x_t):
        h, c = carry
        gates = x_t @ w_ih.T + h @ w_hh.T + b
        i = jax.nn.sigmoid(gates[:, 0 * H:1 * H])
        f = jax.nn.sigmoid(gates[:, 1 * H:2 * H])
        g = jnp.tanh(gates[:, 2 * H:3 * H])
        o = jax.nn.sigmoid(gates[:, 3 * H:4 * H])
        c = f * c + i * g
        h = o * jnp.tanh(c)
        return (h, c), h

    init = (jnp.zeros((B, H), jnp.float32), jnp.zeros((B, H), jnp.float32))
    _, hs = jax.lax.scan(step, init, jnp.transpose(x, (1, 0, 2)))
    h_flat = jnp.transpose(hs, (1, 0, 2)).reshape(-1, H)
    logits = h_flat @ params["w_fc"].T + params["b_fc"]
    return jax.nn.log_softmax(logits, axis=-1)


# ------------------------------------ main ---------------------------------------
if __name__ == "__main__":
    B, T = 2, 8           # batch of contexts, padded sentence length
    VOCAB = 32
    E = 32                # glove_dim == embedding_dim
    H = 32                # hidden_dim
    NUM_TAGS = 8          # num_of_tags

    key = jax.random.PRNGKey(0)
    k_ids, k_emb, k_ih, k_hh, k_bih, k_bhh, k_wfc, k_bfc, k_lab = jax.random.split(key, 9)

    # deterministic "sentences" (word ids) and labels
    token_ids = jax.random.randint(k_ids, (B, T), 0, VOCAB, dtype=jnp.int32)
    labels = jax.random.randint(k_lab, (B, T), 0, NUM_TAGS, dtype=jnp.int32)

    # deterministic parameter init (PyTorch-style uniform(-1/sqrt(H), 1/sqrt(H)))
    s = 1.0 / jnp.sqrt(jnp.float32(H))
    params = {
        "embedding": jax.random.normal(k_emb, (VOCAB, E), jnp.float32) * 0.1,
        "w_ih": jax.random.uniform(k_ih, (4 * H, E), jnp.float32, -s, s),
        "w_hh": jax.random.uniform(k_hh, (4 * H, H), jnp.float32, -s, s),
        "b_comb": (jax.random.uniform(k_bih, (1, 4 * H), jnp.float32, -s, s)
                   + jax.random.uniform(k_bhh, (1, 4 * H), jnp.float32, -s, s)),
        "w_fc": jax.random.uniform(k_wfc, (NUM_TAGS, H), jnp.float32, -s, s),
        "b_fc": jax.random.uniform(k_bfc, (1, NUM_TAGS), jnp.float32, -s, s),
    }

    log_probs, out_labels = jax.jit(model_forward)(token_ids, labels, params)
    jax.block_until_ready(log_probs)

    assert log_probs.shape == (B * T, NUM_TAGS)
    # sanity 1: rows of log_softmax exponentiate-and-sum to 1
    row_sums = jnp.sum(jnp.exp(log_probs), axis=-1)
    assert bool(jnp.all(jnp.abs(row_sums - 1.0) < 1e-3))
    # sanity 2: matches the pure-JAX f32 reference (bf16 MXU -> loose tolerance)
    ref = _reference_forward(token_ids, params)
    assert bool(jnp.allclose(log_probs, ref, atol=5e-2)), "mismatch vs reference"

    print("KERNEL_OK")
</pallas_src>

<mosaic_0001>
module attributes {stable_mosaic.version = 11 : i64} {
  func.func @_fused_lstm_fc_kernel(%arg0: memref<8x8x32xbf16, #tpu.memory_space<vmem>>, %arg1: memref<32x128xbf16, #tpu.memory_space<vmem>>, %arg2: memref<32x128xbf16, #tpu.memory_space<vmem>>, %arg3: memref<1x128xf32, #tpu.memory_space<vmem>>, %arg4: memref<32x128xbf16, #tpu.memory_space<vmem>>, %arg5: memref<1x128xf32, #tpu.memory_space<vmem>>, %arg6: memref<8x8x128xf32, #tpu.memory_space<vmem>>) attributes {dimension_semantics = [], scalar_prefetch = 0 : i64, scratch_operands = 0 : i64, tpu.core_type = #tpu.core_type<tc>} {
    %c0 = arith.constant 0 : index
    %c0_0 = arith.constant 0 : index
    %c0_1 = arith.constant 0 : index
    %0 = vector.load %arg0[%c0, %c0_0, %c0_1] : memref<8x8x32xbf16, #tpu.memory_space<vmem>>, vector<8x8x32xbf16>
    %1 = vector.shape_cast %0 : vector<8x8x32xbf16> to vector<64x32xbf16>
    %c0_2 = arith.constant 0 : index
    %c0_3 = arith.constant 0 : index
    %2 = vector.load %arg1[%c0_2, %c0_3] : memref<32x128xbf16, #tpu.memory_space<vmem>>, vector<32x128xbf16>
    %cst = arith.constant dense<0.000000e+00> : vector<64x128xf32>
    %3 = tpu.matmul %1, %2, %cst {dimension_numbers = #tpu.dot_dimension_numbers<[1], [0], [0], [1], [0, 0, 1, 1], [], []>} : vector<64x32xbf16>, vector<32x128xbf16>, vector<64x128xf32> -> vector<64x128xf32>
    %c0_4 = arith.constant 0 : index
    %c0_5 = arith.constant 0 : index
    %4 = vector.load %arg3[%c0_4, %c0_5] : memref<1x128xf32, #tpu.memory_space<vmem>>, vector<1x128xf32>
    %5 = vector.broadcast %4 : vector<1x128xf32> to vector<64x128xf32>
    %6 = arith.addf %3, %5 : vector<64x128xf32>
    %c0_6 = arith.constant 0 : index
    %c0_7 = arith.constant 0 : index
    %7 = vector.load %arg2[%c0_6, %c0_7] : memref<32x128xbf16, #tpu.memory_space<vmem>>, vector<32x128xbf16>
    %cst_8 = arith.constant 0.000000e+00 : f32
    %8 = vector.broadcast %cst_8 : f32 to vector<8x32xf32>
    %cst_9 = arith.constant 0.000000e+00 : f32
    %9 = vector.broadcast %cst_9 : f32 to vector<8x32xf32>
    %10 = vector.extract_strided_slice %6 {offsets = [0, 0], sizes = [8, 128], strides = [1, 1]} : vector<64x128xf32> to vector<8x128xf32>
    %11 = arith.truncf %8 : vector<8x32xf32> to vector<8x32xbf16>
    %cst_10 = arith.constant dense<0.000000e+00> : vector<8x128xf32>
    %12 = tpu.matmul %11, %7, %cst_10 {dimension_numbers = #tpu.dot_dimension_numbers<[1], [0], [0], [1], [0, 0, 1, 1], [], []>} : vector<8x32xbf16>, vector<32x128xbf16>, vector<8x128xf32> -> vector<8x128xf32>
    %13 = arith.addf %10, %12 : vector<8x128xf32>
    %14 = vector.extract_strided_slice %13 {offsets = [0, 0], sizes = [8, 32], strides = [1, 1]} : vector<8x128xf32> to vector<8x32xf32>
    %15 = arith.negf %14 : vector<8x32xf32>
    %16 = math.exp %15 : vector<8x32xf32>
    %cst_11 = arith.constant 1.000000e+00 : f32
    %17 = vector.broadcast %cst_11 : f32 to vector<8x32xf32>
    %18 = arith.addf %17, %16 : vector<8x32xf32>
    %19 = arith.divf %17, %18 : vector<8x32xf32>
    %20 = vector.extract_strided_slice %13 {offsets = [0, 32], sizes = [8, 32], strides = [1, 1]} : vector<8x128xf32> to vector<8x32xf32>
    %21 = arith.negf %20 : vector<8x32xf32>
    %22 = math.exp %21 : vector<8x32xf32>
    %cst_12 = arith.constant 1.000000e+00 : f32
    %23 = vector.broadcast %cst_12 : f32 to vector<8x32xf32>
    %24 = arith.addf %23, %22 : vector<8x32xf32>
    %25 = arith.divf %23, %24 : vector<8x32xf32>
    %26 = vector.extract_strided_slice %13 {offsets = [0, 64], sizes = [8, 32], strides = [1, 1]} : vector<8x128xf32> to vector<8x32xf32>
    %27 = math.tanh %26 : vector<8x32xf32>
    %28 = vector.extract_strided_slice %13 {offsets = [0, 96], sizes = [8, 32], strides = [1, 1]} : vector<8x128xf32> to vector<8x32xf32>
    %29 = arith.negf %28 : vector<8x32xf32>
    %30 = math.exp %29 : vector<8x32xf32>
    %cst_13 = arith.constant 1.000000e+00 : f32
    %31 = vector.broadcast %cst_13 : f32 to vector<8x32xf32>
    %32 = arith.addf %31, %30 : vector<8x32xf32>
    %33 = arith.divf %31, %32 : vector<8x32xf32>
    %34 = arith.mulf %25, %9 : vector<8x32xf32>
    %35 = arith.mulf %19, %27 : vector<8x32xf32>
    %36 = arith.addf %34, %35 : vector<8x32xf32>
    %37 = math.tanh %36 : vector<8x32xf32>
    %38 = arith.mulf %33, %37 : vector<8x32xf32>
    %39 = vector.extract_strided_slice %6 {offsets = [8, 0], sizes = [8, 128], strides = [1, 1]} : vector<64x128xf32> to vector<8x128xf32>
    %40 = arith.truncf %38 : vector<8x32xf32> to vector<8x32xbf16>
    %cst_14 = arith.constant dense<0.000000e+00> : vector<8x128xf32>
    %41 = tpu.matmul %40, %7, %cst_14 {dimension_numbers = #tpu.dot_dimension_numbers<[1], [0], [0], [1], [0, 0, 1, 1], [], []>} : vector<8x32xbf16>, vector<32x128xbf16>, vector<8x128xf32> -> vector<8x128xf32>
    %42 = arith.addf %39, %41 : vector<8x128xf32>
    %43 = vector.extract_strided_slice %42 {offsets = [0, 0], sizes = [8, 32], strides = [1, 1]} : vector<8x128xf32> to vector<8x32xf32>
    %44 = arith.negf %43 : vector<8x32xf32>
    %45 = math.exp %44 : vector<8x32xf32>
    %cst_15 = arith.constant 1.000000e+00 : f32
    %46 = vector.broadcast %cst_15 : f32 to vector<8x32xf32>
    %47 = arith.addf %46, %45 : vector<8x32xf32>
    %48 = arith.divf %46, %47 : vector<8x32xf32>
    %49 = vector.extract_strided_slice %42 {offsets = [0, 32], sizes = [8, 32], strides = [1, 1]} : vector<8x128xf32> to vector<8x32xf32>
    %50 = arith.negf %49 : vector<8x32xf32>
    %51 = math.exp %50 : vector<8x32xf32>
    %cst_16 = arith.constant 1.000000e+00 : f32
    %52 = vector.broadcast %cst_16 : f32 to vector<8x32xf32>
    %53 = arith.addf %52, %51 : vector<8x32xf32>
    %54 = arith.divf %52, %53 : vector<8x32xf32>
    %55 = vector.extract_strided_slice %42 {offsets = [0, 64], sizes = [8, 32], strides = [1, 1]} : vector<8x128xf32> to vector<8x32xf32>
    %56 = math.tanh %55 : vector<8x32xf32>
    %57 = vector.extract_strided_slice %42 {offsets = [0, 96], sizes = [8, 32], strides = [1, 1]} : vector<8x128xf32> to vector<8x32xf32>
    %58 = arith.negf %57 : vector<8x32xf32>
    %59 = math.exp %58 : vector<8x32xf32>
    %cst_17 = arith.constant 1.000000e+00 : f32
    %60 = vector.broadcast %cst_17 : f32 to vector<8x32xf32>
    %61 = arith.addf %60, %59 : vector<8x32xf32>
    %62 = arith.divf %60, %61 : vector<8x32xf32>
    %63 = arith.mulf %54, %36 : vector<8x32xf32>
    %64 = arith.mulf %48, %56 : vector<8x32xf32>
    %65 = arith.addf %63, %64 : vector<8x32xf32>
    %66 = math.tanh %65 : vector<8x32xf32>
    %67 = arith.mulf %62, %66 : vector<8x32xf32>
    %68 = vector.extract_strided_slice %6 {offsets = [16, 0], sizes = [8, 128], strides = [1, 1]} : vector<64x128xf32> to vector<8x128xf32>
    %69 = arith.truncf %67 : vector<8x32xf32> to vector<8x32xbf16>
    %cst_18 = arith.constant dense<0.000000e+00> : vector<8x128xf32>
    %70 = tpu.matmul %69, %7, %cst_18 {dimension_numbers = #tpu.dot_dimension_numbers<[1], [0], [0], [1], [0, 0, 1, 1], [], []>} : vector<8x32xbf16>, vector<32x128xbf16>, vector<8x128xf32> -> vector<8x128xf32>
    %71 = arith.addf %68, %70 : vector<8x128xf32>
    %72 = vector.extract_strided_slice %71 {offsets = [0, 0], sizes = [8, 32], strides = [1, 1]} : vector<8x128xf32> to vector<8x32xf32>
    %73 = arith.negf %72 : vector<8x32xf32>
    %74 = math.exp %73 : vector<8x32xf32>
    %cst_19 = arith.constant 1.000000e+00 : f32
    %75 = vector.broadcast %cst_19 : f32 to vector<8x32xf32>
    %76 = arith.addf %75, %74 : vector<8x32xf32>
    %77 = arith.divf %75, %76 : vector<8x32xf32>
    %78 = vector.extract_strided_slice %71 {offsets = [0, 32], sizes = [8, 32], strides = [1, 1]} : vector<8x128xf32> to vector<8x32xf32>
    %79 = arith.negf %78 : vector<8x32xf32>
    %80 = math.exp %79 : vector<8x32xf32>
    %cst_20 = arith.constant 1.000000e+00 : f32
    %81 = vector.broadcast %cst_20 : f32 to vector<8x32xf32>
    %82 = arith.addf %81, %80 : vector<8x32xf32>
    %83 = arith.divf %81, %82 : vector<8x32xf32>
    %84 = vector.extract_strided_slice %71 {offsets = [0, 64], sizes = [8, 32], strides = [1, 1]} : vector<8x128xf32> to vector<8x32xf32>
    %85 = math.tanh %84 : vector<8x32xf32>
    %86 = vector.extract_strided_slice %71 {offsets = [0, 96], sizes = [8, 32], strides = [1, 1]} : vector<8x128xf32> to vector<8x32xf32>
    %87 = arith.negf %86 : vector<8x32xf32>
    %88 = math.exp %87 : vector<8x32xf32>
    %cst_21 = arith.constant 1.000000e+00 : f32
    %89 = vector.broadcast %cst_21 : f32 to vector<8x32xf32>
    %90 = arith.addf %89, %88 : vector<8x32xf32>
    %91 = arith.divf %89, %90 : vector<8x32xf32>
    %92 = arith.mulf %83, %65 : vector<8x32xf32>
    %93 = arith.mulf %77, %85 : vector<8x32xf32>
    %94 = arith.addf %92, %93 : vector<8x32xf32>
    %95 = math.tanh %94 : vector<8x32xf32>
    %96 = arith.mulf %91, %95 : vector<8x32xf32>
    %97 = vector.extract_strided_slice %6 {offsets = [24, 0], sizes = [8, 128], strides = [1, 1]} : vector<64x128xf32> to vector<8x128xf32>
    %98 = arith.truncf %96 : vector<8x32xf32> to vector<8x32xbf16>
    %cst_22 = arith.constant dense<0.000000e+00> : vector<8x128xf32>
    %99 = tpu.matmul %98, %7, %cst_22 {dimension_numbers = #tpu.dot_dimension_numbers<[1], [0], [0], [1], [0, 0, 1, 1], [], []>} : vector<8x32xbf16>, vector<32x128xbf16>, vector<8x128xf32> -> vector<8x128xf32>
    %100 = arith.addf %97, %99 : vector<8x128xf32>
    %101 = vector.extract_strided_slice %100 {offsets = [0, 0], sizes = [8, 32], strides = [1, 1]} : vector<8x128xf32> to vector<8x32xf32>
    %102 = arith.negf %101 : vector<8x32xf32>
    %103 = math.exp %102 : vector<8x32xf32>
    %cst_23 = arith.constant 1.000000e+00 : f32
    %104 = vector.broadcast %cst_23 : f32 to vector<8x32xf32>
    %105 = arith.addf %104, %103 : vector<8x32xf32>
    %106 = arith.divf %104, %105 : vector<8x32xf32>
    %107 = vector.extract_strided_slice %100 {offsets = [0, 32], sizes = [8, 32], strides = [1, 1]} : vector<8x128xf32> to vector<8x32xf32>
    %108 = arith.negf %107 : vector<8x32xf32>
    %109 = math.exp %108 : vector<8x32xf32>
    %cst_24 = arith.constant 1.000000e+00 : f32
    %110 = vector.broadcast %cst_24 : f32 to vector<8x32xf32>
    %111 = arith.addf %110, %109 : vector<8x32xf32>
    %112 = arith.divf %110, %111 : vector<8x32xf32>
    %113 = vector.extract_strided_slice %100 {offsets = [0, 64], sizes = [8, 32], strides = [1, 1]} : vector<8x128xf32> to vector<8x32xf32>
    %114 = math.tanh %113 : vector<8x32xf32>
    %115 = vector.extract_strided_slice %100 {offsets = [0, 96], sizes = [8, 32], strides = [1, 1]} : vector<8x128xf32> to vector<8x32xf32>
    %116 = arith.negf %115 : vector<8x32xf32>
    %117 = math.exp %116 : vector<8x32xf32>
    %cst_25 = arith.constant 1.000000e+00 : f32
    %118 = vector.broadcast %cst_25 : f32 to vector<8x32xf32>
    %119 = arith.addf %118, %117 : vector<8x32xf32>
    %120 = arith.divf %118, %119 : vector<8x32xf32>
    %121 = arith.mulf %112, %94 : vector<8x32xf32>
    %122 = arith.mulf %106, %114 : vector<8x32xf32>
    %123 = arith.addf %121, %122 : vector<8x32xf32>
    %124 = math.tanh %123 : vector<8x32xf32>
    %125 = arith.mulf %120, %124 : vector<8x32xf32>
    %126 = vector.extract_strided_slice %6 {offsets = [32, 0], sizes = [8, 128], strides = [1, 1]} : vector<64x128xf32> to vector<8x128xf32>
    %127 = arith.truncf %125 : vector<8x32xf32> to vector<8x32xbf16>
    %cst_26 = arith.constant dense<0.000000e+00> : vector<8x128xf32>
    %128 = tpu.matmul %127, %7, %cst_26 {dimension_numbers = #tpu.dot_dimension_numbers<[1], [0], [0], [1], [0, 0, 1, 1], [], []>} : vector<8x32xbf16>, vector<32x128xbf16>, vector<8x128xf32> -> vector<8x128xf32>
    %129 = arith.addf %126, %128 : vector<8x128xf32>
    %130 = vector.extract_strided_slice %129 {offsets = [0, 0], sizes = [8, 32], strides = [1, 1]} : vector<8x128xf32> to vector<8x32xf32>
    %131 = arith.negf %130 : vector<8x32xf32>
    %132 = math.exp %131 : vector<8x32xf32>
    %cst_27 = arith.constant 1.000000e+00 : f32
    %133 = vector.broadcast %cst_27 : f32 to vector<8x32xf32>
    %134 = arith.addf %133, %132 : vector<8x32xf32>
    %135 = arith.divf %133, %134 : vector<8x32xf32>
    %136 = vector.extract_strided_slice %129 {offsets = [0, 32], sizes = [8, 32], strides = [1, 1]} : vector<8x128xf32> to vector<8x32xf32>
    %137 = arith.negf %136 : vector<8x32xf32>
    %138 = math.exp %137 : vector<8x32xf32>
    %cst_28 = arith.constant 1.000000e+00 : f32
    %139 = vector.broadcast %cst_28 : f32 to vector<8x32xf32>
    %140 = arith.addf %139, %138 : vector<8x32xf32>
    %141 = arith.divf %139, %140 : vector<8x32xf32>
    %142 = vector.extract_strided_slice %129 {offsets = [0, 64], sizes = [8, 32], strides = [1, 1]} : vector<8x128xf32> to vector<8x32xf32>
    %143 = math.tanh %142 : vector<8x32xf32>
    %144 = vector.extract_strided_slice %129 {offsets = [0, 96], sizes = [8, 32], strides = [1, 1]} : vector<8x128xf32> to vector<8x32xf32>
    %145 = arith.negf %144 : vector<8x32xf32>
    %146 = math.exp %145 : vector<8x32xf32>
    %cst_29 = arith.constant 1.000000e+00 : f32
    %147 = vector.broadcast %cst_29 : f32 to vector<8x32xf32>
    %148 = arith.addf %147, %146 : vector<8x32xf32>
    %149 = arith.divf %147, %148 : vector<8x32xf32>
    %150 = arith.mulf %141, %123 : vector<8x32xf32>
    %151 = arith.mulf %135, %143 : vector<8x32xf32>
    %152 = arith.addf %150, %151 : vector<8x32xf32>
    %153 = math.tanh %152 : vector<8x32xf32>
    %154 = arith.mulf %149, %153 : vector<8x32xf32>
    %155 = vector.extract_strided_slice %6 {offsets = [40, 0], sizes = [8, 128], strides = [1, 1]} : vector<64x128xf32> to vector<8x128xf32>
    %156 = arith.truncf %154 : vector<8x32xf32> to vector<8x32xbf16>
    %cst_30 = arith.constant dense<0.000000e+00> : vector<8x128xf32>
    %157 = tpu.matmul %156, %7, %cst_30 {dimension_numbers = #tpu.dot_dimension_numbers<[1], [0], [0], [1], [0, 0, 1, 1], [], []>} : vector<8x32xbf16>, vector<32x128xbf16>, vector<8x128xf32> -> vector<8x128xf32>
    %158 = arith.addf %155, %157 : vector<8x128xf32>
    %159 = vector.extract_strided_slice %158 {offsets = [0, 0], sizes = [8, 32], strides = [1, 1]} : vector<8x128xf32> to vector<8x32xf32>
    %160 = arith.negf %159 : vector<8x32xf32>
    %161 = math.exp %160 : vector<8x32xf32>
    %cst_31 = arith.constant 1.000000e+00 : f32
    %162 = vector.broadcast %cst_31 : f32 to vector<8x32xf32>
    %163 = arith.addf %162, %161 : vector<8x32xf32>
    %164 = arith.divf %162, %163 : vector<8x32xf32>
    %165 = vector.extract_strided_slice %158 {offsets = [0, 32], sizes = [8, 32], strides = [1, 1]} : vector<8x128xf32> to vector<8x32xf32>
    %166 = arith.negf %165 : vector<8x32xf32>
    %167 = math.exp %166 : vector<8x32xf32>
    %cst_32 = arith.constant 1.000000e+00 : f32
    %168 = vector.broadcast %cst_32 : f32 to vector<8x32xf32>
    %169 = arith.addf %168, %167 : vector<8x32xf32>
    %170 = arith.divf %168, %169 : vector<8x32xf32>
    %171 = vector.extract_strided_slice %158 {offsets = [0, 64], sizes = [8, 32], strides = [1, 1]} : vector<8x128xf32> to vector<8x32xf32>
    %172 = math.tanh %171 : vector<8x32xf32>
    %173 = vector.extract_strided_slice %158 {offsets = [0, 96], sizes = [8, 32], strides = [1, 1]} : vector<8x128xf32> to vector<8x32xf32>
    %174 = arith.negf %173 : vector<8x32xf32>
    %175 = math.exp %174 : vector<8x32xf32>
    %cst_33 = arith.constant 1.000000e+00 : f32
    %176 = vector.broadcast %cst_33 : f32 to vector<8x32xf32>
    %177 = arith.addf %176, %175 : vector<8x32xf32>
    %178 = arith.divf %176, %177 : vector<8x32xf32>
    %179 = arith.mulf %170, %152 : vector<8x32xf32>
    %180 = arith.mulf %164, %172 : vector<8x32xf32>
    %181 = arith.addf %179, %180 : vector<8x32xf32>
    %182 = math.tanh %181 : vector<8x32xf32>
    %183 = arith.mulf %178, %182 : vector<8x32xf32>
    %184 = vector.extract_strided_slice %6 {offsets = [48, 0], sizes = [8, 128], strides = [1, 1]} : vector<64x128xf32> to vector<8x128xf32>
    %185 = arith.truncf %183 : vector<8x32xf32> to vector<8x32xbf16>
    %cst_34 = arith.constant dense<0.000000e+00> : vector<8x128xf32>
    %186 = tpu.matmul %185, %7, %cst_34 {dimension_numbers = #tpu.dot_dimension_numbers<[1], [0], [0], [1], [0, 0, 1, 1], [], []>} : vector<8x32xbf16>, vector<32x128xbf16>, vector<8x128xf32> -> vector<8x128xf32>
    %187 = arith.addf %184, %186 : vector<8x128xf32>
    %188 = vector.extract_strided_slice %187 {offsets = [0, 0], sizes = [8, 32], strides = [1, 1]} : vector<8x128xf32> to vector<8x32xf32>
    %189 = arith.negf %188 : vector<8x32xf32>
    %190 = math.exp %189 : vector<8x32xf32>
    %cst_35 = arith.constant 1.000000e+00 : f32
    %191 = vector.broadcast %cst_35 : f32 to vector<8x32xf32>
    %192 = arith.addf %191, %190 : vector<8x32xf32>
    %193 = arith.divf %191, %192 : vector<8x32xf32>
    %194 = vector.extract_strided_slice %187 {offsets = [0, 32], sizes = [8, 32], strides = [1, 1]} : vector<8x128xf32> to vector<8x32xf32>
    %195 = arith.negf %194 : vector<8x32xf32>
    %196 = math.exp %195 : vector<8x32xf32>
    %cst_36 = arith.constant 1.000000e+00 : f32
    %197 = vector.broadcast %cst_36 : f32 to vector<8x32xf32>
    %198 = arith.addf %197, %196 : vector<8x32xf32>
    %199 = arith.divf %197, %198 : vector<8x32xf32>
    %200 = vector.extract_strided_slice %187 {offsets = [0, 64], sizes = [8, 32], strides = [1, 1]} : vector<8x128xf32> to vector<8x32xf32>
    %201 = math.tanh %200 : vector<8x32xf32>
    %202 = vector.extract_strided_slice %187 {offsets = [0, 96], sizes = [8, 32], strides = [1, 1]} : vector<8x128xf32> to vector<8x32xf32>
    %203 = arith.negf %202 : vector<8x32xf32>
    %204 = math.exp %203 : vector<8x32xf32>
    %cst_37 = arith.constant 1.000000e+00 : f32
    %205 = vector.broadcast %cst_37 : f32 to vector<8x32xf32>
    %206 = arith.addf %205, %204 : vector<8x32xf32>
    %207 = arith.divf %205, %206 : vector<8x32xf32>
    %208 = arith.mulf %199, %181 : vector<8x32xf32>
    %209 = arith.mulf %193, %201 : vector<8x32xf32>
    %210 = arith.addf %208, %209 : vector<8x32xf32>
    %211 = math.tanh %210 : vector<8x32xf32>
    %212 = arith.mulf %207, %211 : vector<8x32xf32>
    %213 = vector.extract_strided_slice %6 {offsets = [56, 0], sizes = [8, 128], strides = [1, 1]} : vector<64x128xf32> to vector<8x128xf32>
    %214 = arith.truncf %212 : vector<8x32xf32> to vector<8x32xbf16>
    %cst_38 = arith.constant dense<0.000000e+00> : vector<8x128xf32>
    %215 = tpu.matmul %214, %7, %cst_38 {dimension_numbers = #tpu.dot_dimension_numbers<[1], [0], [0], [1], [0, 0, 1, 1], [], []>} : vector<8x32xbf16>, vector<32x128xbf16>, vector<8x128xf32> -> vector<8x128xf32>
    %216 = arith.addf %213, %215 : vector<8x128xf32>
    %217 = vector.extract_strided_slice %216 {offsets = [0, 0], sizes = [8, 32], strides = [1, 1]} : vector<8x128xf32> to vector<8x32xf32>
    %218 = arith.negf %217 : vector<8x32xf32>
    %219 = math.exp %218 : vector<8x32xf32>
    %cst_39 = arith.constant 1.000000e+00 : f32
    %220 = vector.broadcast %cst_39 : f32 to vector<8x32xf32>
    %221 = arith.addf %220, %219 : vector<8x32xf32>
    %222 = arith.divf %220, %221 : vector<8x32xf32>
    %223 = vector.extract_strided_slice %216 {offsets = [0, 32], sizes = [8, 32], strides = [1, 1]} : vector<8x128xf32> to vector<8x32xf32>
    %224 = arith.negf %223 : vector<8x32xf32>
    %225 = math.exp %224 : vector<8x32xf32>
    %cst_40 = arith.constant 1.000000e+00 : f32
    %226 = vector.broadcast %cst_40 : f32 to vector<8x32xf32>
    %227 = arith.addf %226, %225 : vector<8x32xf32>
    %228 = arith.divf %226, %227 : vector<8x32xf32>
    %229 = vector.extract_strided_slice %216 {offsets = [0, 64], sizes = [8, 32], strides = [1, 1]} : vector<8x128xf32> to vector<8x32xf32>
    %230 = math.tanh %229 : vector<8x32xf32>
    %231 = vector.extract_strided_slice %216 {offsets = [0, 96], sizes = [8, 32], strides = [1, 1]} : vector<8x128xf32> to vector<8x32xf32>
    %232 = arith.negf %231 : vector<8x32xf32>
    %233 = math.exp %232 : vector<8x32xf32>
    %cst_41 = arith.constant 1.000000e+00 : f32
    %234 = vector.broadcast %cst_41 : f32 to vector<8x32xf32>
    %235 = arith.addf %234, %233 : vector<8x32xf32>
    %236 = arith.divf %234, %235 : vector<8x32xf32>
    %237 = arith.mulf %228, %210 : vector<8x32xf32>
    %238 = arith.mulf %222, %230 : vector<8x32xf32>
    %239 = arith.addf %237, %238 : vector<8x32xf32>
    %240 = math.tanh %239 : vector<8x32xf32>
    %241 = arith.mulf %236, %240 : vector<8x32xf32>
    %242 = tpu.concatenate %38, %67, %96, %125, %154, %183, %212, %241 in 0 : vector<8x32xf32>, vector<8x32xf32>, vector<8x32xf32>, vector<8x32xf32>, vector<8x32xf32>, vector<8x32xf32>, vector<8x32xf32>, vector<8x32xf32> -> vector<64x32xf32>
    %243 = arith.truncf %242 : vector<64x32xf32> to vector<64x32xbf16>
    %c0_42 = arith.constant 0 : index
    %c0_43 = arith.constant 0 : index
    %244 = vector.load %arg4[%c0_42, %c0_43] : memref<32x128xbf16, #tpu.memory_space<vmem>>, vector<32x128xbf16>
    %cst_44 = arith.constant dense<0.000000e+00> : vector<64x128xf32>
    %245 = tpu.matmul %243, %244, %cst_44 {dimension_numbers = #tpu.dot_dimension_numbers<[1], [0], [0], [1], [0, 0, 1, 1], [], []>} : vector<64x32xbf16>, vector<32x128xbf16>, vector<64x128xf32> -> vector<64x128xf32>
    %c0_45 = arith.constant 0 : index
    %c0_46 = arith.constant 0 : index
    %246 = vector.load %arg5[%c0_45, %c0_46] : memref<1x128xf32, #tpu.memory_space<vmem>>, vector<1x128xf32>
    %247 = vector.broadcast %246 : vector<1x128xf32> to vector<64x128xf32>
    %248 = arith.addf %245, %247 : vector<64x128xf32>
    %cst_47 = arith.constant dense<0xFF800000> : vector<64xf32>
    %249 = vector.multi_reduction <maximumf>, %248, %cst_47 [1] : vector<64x128xf32> to vector<64xf32>
    %250 = vector.shape_cast %249 : vector<64xf32> to vector<64x1xf32>
    %251 = vector.broadcast %250 : vector<64x1xf32> to vector<64x128xf32>
    %252 = arith.subf %248, %251 : vector<64x128xf32>
    %253 = math.exp %252 : vector<64x128xf32>
    %cst_48 = arith.constant dense<0.000000e+00> : vector<64xf32>
    %254 = vector.multi_reduction <add>, %253, %cst_48 [1] : vector<64x128xf32> to vector<64xf32>
    %255 = vector.shape_cast %254 : vector<64xf32> to vector<64x1xf32>
    %256 = math.log %255 : vector<64x1xf32>
    %257 = vector.broadcast %256 : vector<64x1xf32> to vector<64x128xf32>
    %258 = arith.subf %252, %257 : vector<64x128xf32>
    %259 = vector.shape_cast %258 : vector<64x128xf32> to vector<8x8x128xf32>
    %c0_49 = arith.constant 0 : index
    %c0_50 = arith.constant 0 : index
    %c0_51 = arith.constant 0 : index
    %260 = vector.load %arg6[%c0_49, %c0_50, %c0_51] : memref<8x8x128xf32, #tpu.memory_space<vmem>>, vector<8x8x128xf32>
    tpu.vector_store %arg6[%c0_49, %c0_50, %c0_51], %259 {strides = array<i32>} : memref<8x8x128xf32, #tpu.memory_space<vmem>>, vector<8x8x128xf32>,
    return
  }
}

</mosaic_0001>

<llo_original>
// kernel: model_forward.1
$region0: #{model_forward.1}
  #allocation0 [shape = 'u32[]', space=smem, size = 0x4, offset = 0x4, fixed_abs, tag = 'smem constant byte address 0x4 - core index']
  #allocation1 [shape = 'u32[72,128]{1,0:T(1,128)}', space=vmem, size = 0x9000, scoped, tag = 'internal scratch']
  %s0 = inlined_call_operand.vmem [shape: bf16[8,8,32], index: 0, kind: input, shape index: {}]
  %s1 = inlined_call_operand.vmem [shape: bf16[32,128], index: 1, kind: input, shape index: {}]
  %s2 = inlined_call_operand.vmem [shape: bf16[32,128], index: 2, kind: input, shape index: {}]
  %s3 = inlined_call_operand.vmem [shape: f32[1,128], index: 3, kind: input, shape index: {}]
  %s4 = inlined_call_operand.vmem [shape: bf16[32,128], index: 4, kind: input, shape index: {}]
  %s5 = inlined_call_operand.vmem [shape: f32[1,128], index: 5, kind: input, shape index: {}]
  %s6 = inlined_call_operand.vmem [shape: f32[8,8,128], index: 6, kind: output, shape index: {}]
  %s7 = sld [smem:[#allocation0]]
  $region34: #{model_forward.1} parent=0
    _
  %s9 = ssub.s32 1, %s7
  %s10 = scalar_select 0, %s9, %s7
  // Predicated region
  $region2: #{model_forward.1} parent=0 // pred_check
    _
  $region3: #{model_forward.1} parent=0 // pred_check_branch
    %12 = sbr.rel (0) target = $region5
  $region4: #{model_forward.1} parent=0 // pred_region
    _
  $region5: #{model_forward.1} parent=0 // pred_fallthru
    _
  // Predicated region
  $region6: #{model_forward.1} parent=0 // pred_check
    _
  $region7: #{model_forward.1} parent=0 // pred_check_branch
    %14 = sbr.rel (0) target = $region9
  $region8: #{model_forward.1} parent=0 // pred_region
    _
  $region9: #{model_forward.1} parent=0 // pred_fallthru
    _
  // Predicated region
  $region10: #{model_forward.1} parent=0 // pred_check
    _
  $region11: #{model_forward.1} parent=0 // pred_check_branch
    %16 = sbr.rel (0) target = $region13
  $region12: #{model_forward.1} parent=0 // pred_region
    _
  $region13: #{model_forward.1} parent=0 // pred_fallthru
    _
  // Predicated region
  $region14: #{model_forward.1} parent=0 // pred_check
    _
  $region15: #{model_forward.1} parent=0 // pred_check_branch
    %18 = sbr.rel (0) target = $region17
  $region16: #{model_forward.1} parent=0 // pred_region
    _
  $region17: #{model_forward.1} parent=0 // pred_fallthru
    _
  // Predicated region
  $region18: #{model_forward.1} parent=0 // pred_check
    _
  $region19: #{model_forward.1} parent=0 // pred_check_branch
    %20 = sbr.rel (0) target = $region21
  $region20: #{model_forward.1} parent=0 // pred_region
    _
  $region21: #{model_forward.1} parent=0 // pred_fallthru
    _
  // Predicated region
  $region22: #{model_forward.1} parent=0 // pred_check
    _
  $region23: #{model_forward.1} parent=0 // pred_check_branch
    %22 = sbr.rel (0) target = $region25
  $region24: #{model_forward.1} parent=0 // pred_region
    _
  $region25: #{model_forward.1} parent=0 // pred_fallthru
    _
  %v24 = vld [vmem:[%s0] sm:$0xf]
  %v25 = vld [vmem:[%s0 + $0x4] sm:$0xf]
  %v26 = vld [vmem:[%s0 + $0x8] sm:$0xf]
  %v27 = vld [vmem:[%s0 + $0xc] sm:$0xf]
  %v28 = vld [vmem:[%s0 + $0x10] sm:$0xf]
  %v29 = vld [vmem:[%s0 + $0x14] sm:$0xf]
  %v30 = vld [vmem:[%s0 + $0x18] sm:$0xf]
  %v31 = vld [vmem:[%s0 + $0x1c] sm:$0xf]
  %v32 = vld [vmem:[%s1] sm:$0xf]
  %v33 = vld [vmem:[%s1 + $0x4] sm:$0xf]
  %v34 = vld [vmem:[%s1 + $0x8] sm:$0xf]
  %v35 = vld [vmem:[%s1 + $0xc] sm:$0xf]
  %v36 = vld [vmem:[%s3] sm:$0x1]
  %v38 = vperm.slane %v36, 0
  %v48 = vunpack.c.l.b16 %v24
  %v49 = vunpack.c.l.b16 %v25
  %v50 = vunpack.c.l.b16 %v26
  %v51 = vunpack.c.l.b16 %v27
  %v52 = vunpack.c.l.b16 %v28
  %v53 = vunpack.c.l.b16 %v29
  %v54 = vunpack.c.l.b16 %v30
  %v55 = vunpack.c.l.b16 %v31
  %v56 = vpack.c.b16 %v49, %v48
  %v57 = vpack.c.b16 %v51, %v50
  %v58 = vpack.c.b16 %v53, %v52
  %v59 = vpack.c.b16 %v55, %v54
  %v64 = vunpack.c.l.b16 %v32
  %v65 = vunpack.c.l.b16 %v33
  %v66 = vunpack.c.l.b16 %v34
  %v67 = vunpack.c.l.b16 %v35
  %v68 = vpack.c.b16 %v65, %v64
  %v69 = vpack.c.b16 %v67, %v66
  %vm72 = vcmask 261120
  %v74 = vsel %vm72, %v56, 0
  %v77 = vsel %vm72, %v57, 0
  %v80 = vsel %vm72, %v58, 0
  %v83 = vsel %vm72, %v59, 0
  %85 = vmatpush.bf16.msra.mxu0 0
  %86 = vmatpush.bf16.msra.mxu0 0
  %87 = vmatpush.bf16.msra.mxu0 0
  %88 = vmatpush.bf16.msra.mxu0 0
  %89 = vmatpush.bf16.msra.mxu0 0
  %90 = vmatpush.bf16.msra.mxu0 0
  %91 = vmatpush.bf16.msra.mxu0 %v69
  %92 = vmatpush.bf16.msra.mxu0 %v68
  %93 = vmatmul.bf16.gmra.mxu0 %v74
  %v94 = vpop.f32.mrf.mxu0
  %v95 = vadd.f32 %v38, %v94
  %v96 = vpop.f32.mrf.mxu0
  %v97 = vadd.f32 %v38, %v96
  %98 = vmatmul.bf16.gmra.mxu0 %v77
  %v99 = vpop.f32.mrf.mxu0
  %v100 = vadd.f32 %v38, %v99
  %v101 = vpop.f32.mrf.mxu0
  %v102 = vadd.f32 %v38, %v101
  %103 = vmatmul.bf16.gmra.mxu0 %v80
  %v104 = vpop.f32.mrf.mxu0
  %v105 = vadd.f32 %v38, %v104
  %v106 = vpop.f32.mrf.mxu0
  %v107 = vadd.f32 %v38, %v106
  %108 = vmatmul.bf16.gmra.mxu0 %v83
  %v109 = vpop.f32.mrf.mxu0
  %v110 = vadd.f32 %v38, %v109
  %v111 = vpop.f32.mrf.mxu0
  %v112 = vadd.f32 %v38, %v111
  %113 = vdwg.mxu0
  %v114 = vld [vmem:[%s2] sm:$0xf]
  %v115 = vld [vmem:[%s2 + $0x4] sm:$0xf]
  %v116 = vld [vmem:[%s2 + $0x8] sm:$0xf]
  %v117 = vld [vmem:[%s2 + $0xc] sm:$0xf]
  %v122 = vunpack.c.l.b16 %v114
  %v123 = vunpack.c.l.b16 %v115
  %v124 = vunpack.c.l.b16 %v116
  %v125 = vunpack.c.l.b16 %v117
  %v126 = vpack.c.b16 %v123, %v122
  %v127 = vpack.c.b16 %v125, %v124
  %v131 = vsel %vm72, 0, 0
  %133 = vmatpush.bf16.msra.mxu0 0
  %134 = vmatpush.bf16.msra.mxu0 0
  %135 = vmatpush.bf16.msra.mxu0 0
  %136 = vmatpush.bf16.msra.mxu0 0
  %137 = vmatpush.bf16.msra.mxu0 0
  %138 = vmatpush.bf16.msra.mxu0 0
  %139 = vmatpush.bf16.msra.mxu0 %v127
  %140 = vmatpush.bf16.msra.mxu0 %v126
  %141 = vmatmul.bf16.gmra.mxu0 %v131
  %v142 = vpop.f32.mrf.mxu0
  %v143 = vadd.f32 0.0, %v142
  %v144 = vpop.f32.mrf.mxu0
  %145 = vdwg.mxu0
  %v146 = vadd.f32 %v95, %v143
  %v147 = vxor.u32 %v146, 2147483648
  %v148 = vmul.f32 %v147, 1.442695
  %v149 = vpow.pop %v148
  %v150 = vadd.f32 %v149, 1.0
  %v151 = vrcp.pop %v150
  %v152 = vmul.f32 %v150, %v151
  %v153 = vsub.f32 1.0, %v152
  %v154 = vmul.f32 %v151, %v153
  %v155 = vadd.f32 %v151, %v154
  %vm156 = vweird.f32 %v150
  %vm157 = vweird.f32 %v151
  %vm158 = vmor %vm156, %vm157
  %v159 = vsel %vm158, %v151, %v155
  %v160 = vand.u32 2147483647, %v150
  %vm161 = vcmp.eq.f32.partialorder %v160, 8.507059e+37
  %v162 = vand.u32 %v150, 2147483648
  %v163 = vor.u32 1.1754944e-38, %v162
  %v164 = vsel %vm161, %v163, %v159
  %v165 = vmul.f32 1.0, %v164
  %v166 = vtanh.pop %v146
  %v167 = vmul.f32 %v165, 0.0
  %169 = vrot.lane.b32.xlu0 %v166, 64
  %v170 = vpop.permute.xlu0 %169
  %v172 = vmul.f32 %v165, %v170
  %174 = vrot.lane.b32.xlu0 %v172, 32
  %v175 = vpop.permute.xlu0 %174
  %v177 = vadd.f32 %v167, %v175
  %v178 = vtanh.pop %v177
  %180 = vrot.lane.b32.xlu0 %v178, 64
  %v181 = vpop.permute.xlu0 %180
  %v183 = vmul.f32 %v165, %v181
  %v184 = vpack.c.bf16 %v183, %v183
  %186 = vrot.lane.b32.xlu0 %v184, 32
  %v187 = vpop.permute.xlu0 %186
  %v189 = vsel %vm72, %v187, 0
  %191 = vmatpush.bf16.msra.mxu0 0
  %192 = vmatpush.bf16.msra.mxu0 0
  %193 = vmatpush.bf16.msra.mxu0 0
  %194 = vmatpush.bf16.msra.mxu0 0
  %195 = vmatpush.bf16.msra.mxu0 0
  %196 = vmatpush.bf16.msra.mxu0 0
  %197 = vmatpush.bf16.msra.mxu0 %v127
  %198 = vmatpush.bf16.msra.mxu0 %v126
  %199 = vmatmul.bf16.gmra.mxu0 %v189
  %v200 = vpop.f32.mrf.mxu0
  %v201 = vadd.f32 0.0, %v200
  %v202 = vpop.f32.mrf.mxu0
  %203 = vdwg.mxu0
  %v204 = vadd.f32 %v97, %v201
  %v205 = vxor.u32 %v204, 2147483648
  %v206 = vmul.f32 %v205, 1.442695
  %v207 = vpow.pop %v206
  %v208 = vadd.f32 %v207, 1.0
  %v209 = vrcp.pop %v208
  %v210 = vmul.f32 %v208, %v209
  %v211 = vsub.f32 1.0, %v210
  %v212 = vmul.f32 %v209, %v211
  %v213 = vadd.f32 %v209, %v212
  %vm214 = vweird.f32 %v208
  %vm215 = vweird.f32 %v209
  %vm216 = vmor %vm214, %vm215
  %v217 = vsel %vm216, %v209, %v213
  %v218 = vand.u32 2147483647, %v208
  %vm219 = vcmp.eq.f32.partialorder %v218, 8.507059e+37
  %v220 = vand.u32 %v208, 2147483648
  %v221 = vor.u32 1.1754944e-38, %v220
  %v222 = vsel %vm219, %v221, %v217
  %v223 = vmul.f32 1.0, %v222
  %v224 = vtanh.pop %v204
  %v225 = vmul.f32 %v223, %v177
  %227 = vrot.lane.b32.xlu0 %v224, 64
  %v228 = vpop.permute.xlu0 %227
  %v230 = vmul.f32 %v223, %v228
  %232 = vrot.lane.b32.xlu0 %v230, 32
  %v233 = vpop.permute.xlu0 %232
  %v235 = vadd.f32 %v225, %v233
  %v236 = vtanh.pop %v235
  %238 = vrot.lane.b32.xlu0 %v236, 64
  %v239 = vpop.permute.xlu0 %238
  %v241 = vmul.f32 %v223, %v239
  %v242 = vpack.c.bf16 %v241, %v241
  %244 = vrot.lane.b32.xlu0 %v242, 32
  %v245 = vpop.permute.xlu0 %244
  %v247 = vsel %vm72, %v245, 0
  %249 = vmatpush.bf16.msra.mxu0 0
  %250 = vmatpush.bf16.msra.mxu0 0
  %251 = vmatpush.bf16.msra.mxu0 0
  %252 = vmatpush.bf16.msra.mxu0 0
  %253 = vmatpush.bf16.msra.mxu0 0
  %254 = vmatpush.bf16.msra.mxu0 0
  %255 = vmatpush.bf16.msra.mxu0 %v127
  %256 = vmatpush.bf16.msra.mxu0 %v126
  %257 = vmatmul.bf16.gmra.mxu0 %v247
  %v258 = vpop.f32.mrf.mxu0
  %v259 = vadd.f32 0.0, %v258
  %v260 = vpop.f32.mrf.mxu0
  %261 = vdwg.mxu0
  %v262 = vadd.f32 %v100, %v259
  %v263 = vxor.u32 %v262, 2147483648
  %v264 = vmul.f32 %v263, 1.442695
  %v265 = vpow.pop %v264
  %v266 = vadd.f32 %v265, 1.0
  %v267 = vrcp.pop %v266
  %v268 = vmul.f32 %v266, %v267
  %v269 = vsub.f32 1.0, %v268
  %v270 = vmul.f32 %v267, %v269
  %v271 = vadd.f32 %v267, %v270
  %vm272 = vweird.f32 %v266
  %vm273 = vweird.f32 %v267
  %vm274 = vmor %vm272, %vm273
  %v275 = vsel %vm274, %v267, %v271
  %v276 = vand.u32 2147483647, %v266
  %vm277 = vcmp.eq.f32.partialorder %v276, 8.507059e+37
  %v278 = vand.u32 %v266, 2147483648
  %v279 = vor.u32 1.1754944e-38, %v278
  %v280 = vsel %vm277, %v279, %v275
  %v281 = vmul.f32 1.0, %v280
  %v282 = vtanh.pop %v262
  %v283 = vmul.f32 %v281, %v235
  %285 = vrot.lane.b32.xlu0 %v282, 64
  %v286 = vpop.permute.xlu0 %285
  %v288 = vmul.f32 %v281, %v286
  %290 = vrot.lane.b32.xlu0 %v288, 32
  %v291 = vpop.permute.xlu0 %290
  %v293 = vadd.f32 %v283, %v291
  %v294 = vtanh.pop %v293
  %296 = vrot.lane.b32.xlu0 %v294, 64
  %v297 = vpop.permute.xlu0 %296
  %v299 = vmul.f32 %v281, %v297
  %v300 = vpack.c.bf16 %v299, %v299
  %302 = vrot.lane.b32.xlu0 %v300, 32
  %v303 = vpop.permute.xlu0 %302
  %v305 = vsel %vm72, %v303, 0
  %307 = vmatpush.bf16.msra.mxu0 0
  %308 = vmatpush.bf16.msra.mxu0 0
  %309 = vmatpush.bf16.msra.mxu0 0
  %310 = vmatpush.bf16.msra.mxu0 0
  %311 = vmatpush.bf16.msra.mxu0 0
  %312 = vmatpush.bf16.msra.mxu0 0
  %313 = vmatpush.bf16.msra.mxu0 %v127
  %314 = vmatpush.bf16.msra.mxu0 %v126
  %315 = vmatmul.bf16.gmra.mxu0 %v305
  %v316 = vpop.f32.mrf.mxu0
  %v317 = vadd.f32 0.0, %v316
  %v318 = vpop.f32.mrf.mxu0
  %319 = vdwg.mxu0
  %v320 = vadd.f32 %v102, %v317
  %v321 = vxor.u32 %v320, 2147483648
  %v322 = vmul.f32 %v321, 1.442695
  %v323 = vpow.pop %v322
  %v324 = vadd.f32 %v323, 1.0
  %v325 = vrcp.pop %v324
  %v326 = vmul.f32 %v324, %v325
  %v327 = vsub.f32 1.0, %v326
  %v328 = vmul.f32 %v325, %v327
  %v329 = vadd.f32 %v325, %v328
  %vm330 = vweird.f32 %v324
  %vm331 = vweird.f32 %v325
  %vm332 = vmor %vm330, %vm331
  %v333 = vsel %vm332, %v325, %v329
  %v334 = vand.u32 2147483647, %v324
  %vm335 = vcmp.eq.f32.partialorder %v334, 8.507059e+37
  %v336 = vand.u32 %v324, 2147483648
  %v337 = vor.u32 1.1754944e-38, %v336
  %v338 = vsel %vm335, %v337, %v333
  %v339 = vmul.f32 1.0, %v338
  %v340 = vtanh.pop %v320
  %v341 = vmul.f32 %v339, %v293
  %343 = vrot.lane.b32.xlu0 %v340, 64
  %v344 = vpop.permute.xlu0 %343
  %v346 = vmul.f32 %v339, %v344
  %348 = vrot.lane.b32.xlu0 %v346, 32
  %v349 = vpop.permute.xlu0 %348
  %v351 = vadd.f32 %v341, %v349
  %v352 = vtanh.pop %v351
  %354 = vrot.lane.b32.xlu0 %v352, 64
  %v355 = vpop.permute.xlu0 %354
  %v357 = vmul.f32 %v339, %v355
  %v358 = vpack.c.bf16 %v357, %v357
  %360 = vrot.lane.b32.xlu0 %v358, 32
  %v361 = vpop.permute.xlu0 %360
  %v363 = vsel %vm72, %v361, 0
  %365 = vmatpush.bf16.msra.mxu0 0
  %366 = vmatpush.bf16.msra.mxu0 0
  %367 = vmatpush.bf16.msra.mxu0 0
  %368 = vmatpush.bf16.msra.mxu0 0
  %369 = vmatpush.bf16.msra.mxu0 0
  %370 = vmatpush.bf16.msra.mxu0 0
  %371 = vmatpush.bf16.msra.mxu0 %v127
  %372 = vmatpush.bf16.msra.mxu0 %v126
  %373 = vmatmul.bf16.gmra.mxu0 %v363
  %v374 = vpop.f32.mrf.mxu0
  %v375 = vadd.f32 0.0, %v374
  %v376 = vpop.f32.mrf.mxu0
  %377 = vdwg.mxu0
  %v378 = vadd.f32 %v105, %v375
  %v379 = vxor.u32 %v378, 2147483648
  %v380 = vmul.f32 %v379, 1.442695
  %v381 = vpow.pop %v380
  %v382 = vadd.f32 %v381, 1.0
  %v383 = vrcp.pop %v382
  %v384 = vmul.f32 %v382, %v383
  %v385 = vsub.f32 1.0, %v384
  %v386 = vmul.f32 %v383, %v385
  %v387 = vadd.f32 %v383, %v386
  %vm388 = vweird.f32 %v382
  %vm389 = vweird.f32 %v383
  %vm390 = vmor %vm388, %vm389
  %v391 = vsel %vm390, %v383, %v387
  %v392 = vand.u32 2147483647, %v382
  %vm393 = vcmp.eq.f32.partialorder %v392, 8.507059e+37
  %v394 = vand.u32 %v382, 2147483648
  %v395 = vor.u32 1.1754944e-38, %v394
  %v396 = vsel %vm393, %v395, %v391
  %v397 = vmul.f32 1.0, %v396
  %v398 = vtanh.pop %v378
  %v399 = vmul.f32 %v397, %v351
  %401 = vrot.lane.b32.xlu0 %v398, 64
  %v402 = vpop.permute.xlu0 %401
  %v404 = vmul.f32 %v397, %v402
  %406 = vrot.lane.b32.xlu0 %v404, 32
  %v407 = vpop.permute.xlu0 %406
  %v409 = vadd.f32 %v399, %v407
  %v410 = vtanh.pop %v409
  %412 = vrot.lane.b32.xlu0 %v410, 64
  %v413 = vpop.permute.xlu0 %412
  %v415 = vmul.f32 %v397, %v413
  %v416 = vpack.c.bf16 %v415, %v415
  %418 = vrot.lane.b32.xlu0 %v416, 32
  %v419 = vpop.permute.xlu0 %418
  %v421 = vsel %vm72, %v419, 0
  %423 = vmatpush.bf16.msra.mxu0 0
  %424 = vmatpush.bf16.msra.mxu0 0
  %425 = vmatpush.bf16.msra.mxu0 0
  %426 = vmatpush.bf16.msra.mxu0 0
  %427 = vmatpush.bf16.msra.mxu0 0
  %428 = vmatpush.bf16.msra.mxu0 0
  %429 = vmatpush.bf16.msra.mxu0 %v127
  %430 = vmatpush.bf16.msra.mxu0 %v126
  %431 = vmatmul.bf16.gmra.mxu0 %v421
  %v432 = vpop.f32.mrf.mxu0
  %v433 = vadd.f32 0.0, %v432
  %v434 = vpop.f32.mrf.mxu0
  %435 = vdwg.mxu0
  %v436 = vadd.f32 %v107, %v433
  %v437 = vxor.u32 %v436, 2147483648
  %v438 = vmul.f32 %v437, 1.442695
  %v439 = vpow.pop %v438
  %v440 = vadd.f32 %v439, 1.0
  %v441 = vrcp.pop %v440
  %v442 = vmul.f32 %v440, %v441
  %v443 = vsub.f32 1.0, %v442
  %v444 = vmul.f32 %v441, %v443
  %v445 = vadd.f32 %v441, %v444
  %vm446 = vweird.f32 %v440
  %vm447 = vweird.f32 %v441
  %vm448 = vmor %vm446, %vm447
  %v449 = vsel %vm448, %v441, %v445
  %v450 = vand.u32 2147483647, %v440
  %vm451 = vcmp.eq.f32.partialorder %v450, 8.507059e+37
  %v452 = vand.u32 %v440, 2147483648
  %v453 = vor.u32 1.1754944e-38, %v452
  %v454 = vsel %vm451, %v453, %v449
  %v455 = vmul.f32 1.0, %v454
  %v456 = vtanh.pop %v436
  %v457 = vmul.f32 %v455, %v409
  %459 = vrot.lane.b32.xlu0 %v456, 64
  %v460 = vpop.permute.xlu0 %459
  %v462 = vmul.f32 %v455, %v460
  %464 = vrot.lane.b32.xlu0 %v462, 32
  %v465 = vpop.permute.xlu0 %464
  %v467 = vadd.f32 %v457, %v465
  %v468 = vtanh.pop %v467
  %470 = vrot.lane.b32.xlu0 %v468, 64
  %v471 = vpop.permute.xlu0 %470
  %v473 = vmul.f32 %v455, %v471
  %v474 = vpack.c.bf16 %v473, %v473
  %476 = vrot.lane.b32.xlu0 %v474, 32
  %v477 = vpop.permute.xlu0 %476
  %v479 = vsel %vm72, %v477, 0
  %481 = vmatpush.bf16.msra.mxu0 0
  %482 = vmatpush.bf16.msra.mxu0 0
  %483 = vmatpush.bf16.msra.mxu0 0
  %484 = vmatpush.bf16.msra.mxu0 0
  %485 = vmatpush.bf16.msra.mxu0 0
  %486 = vmatpush.bf16.msra.mxu0 0
  %487 = vmatpush.bf16.msra.mxu0 %v127
  %488 = vmatpush.bf16.msra.mxu0 %v126
  %489 = vmatmul.bf16.gmra.mxu0 %v479
  %v490 = vpop.f32.mrf.mxu0
  %v491 = vadd.f32 0.0, %v490
  %v492 = vpop.f32.mrf.mxu0
  %493 = vdwg.mxu0
  %v494 = vadd.f32 %v110, %v491
  %v495 = vxor.u32 %v494, 2147483648
  %v496 = vmul.f32 %v495, 1.442695
  %v497 = vpow.pop %v496
  %v498 = vadd.f32 %v497, 1.0
  %v499 = vrcp.pop %v498
  %v500 = vmul.f32 %v498, %v499
  %v501 = vsub.f32 1.0, %v500
  %v502 = vmul.f32 %v499, %v501
  %v503 = vadd.f32 %v499, %v502
  %vm504 = vweird.f32 %v498
  %vm505 = vweird.f32 %v499
  %vm506 = vmor %vm504, %vm505
  %v507 = vsel %vm506, %v499, %v503
  %v508 = vand.u32 2147483647, %v498
  %vm509 = vcmp.eq.f32.partialorder %v508, 8.507059e+37
  %v510 = vand.u32 %v498, 2147483648
  %v511 = vor.u32 1.1754944e-38, %v510
  %v512 = vsel %vm509, %v511, %v507
  %v513 = vmul.f32 1.0, %v512
  %v514 = vtanh.pop %v494
  %v515 = vmul.f32 %v513, %v467
  %517 = vrot.lane.b32.xlu0 %v514, 64
  %v518 = vpop.permute.xlu0 %517
  %v520 = vmul.f32 %v513, %v518
  %522 = vrot.lane.b32.xlu0 %v520, 32
  %v523 = vpop.permute.xlu0 %522
  %v525 = vadd.f32 %v515, %v523
  %v526 = vtanh.pop %v525
  %528 = vrot.lane.b32.xlu0 %v526, 64
  %v529 = vpop.permute.xlu0 %528
  %v531 = vmul.f32 %v513, %v529
  %v532 = vpack.c.bf16 %v531, %v531
  %534 = vrot.lane.b32.xlu0 %v532, 32
  %v535 = vpop.permute.xlu0 %534
  %v537 = vsel %vm72, %v535, 0
  %539 = vmatpush.bf16.msra.mxu0 0
  %540 = vmatpush.bf16.msra.mxu0 0
  %541 = vmatpush.bf16.msra.mxu0 0
  %542 = vmatpush.bf16.msra.mxu0 0
  %543 = vmatpush.bf16.msra.mxu0 0
  %544 = vmatpush.bf16.msra.mxu0 0
  %545 = vmatpush.bf16.msra.mxu0 %v127
  %546 = vmatpush.bf16.msra.mxu0 %v126
  %547 = vmatmul.bf16.gmra.mxu0 %v537
  %v548 = vpop.f32.mrf.mxu0
  %v549 = vadd.f32 0.0, %v548
  %v550 = vpop.f32.mrf.mxu0
  %551 = vdwg.mxu0
  %v552 = vadd.f32 %v112, %v549
  %v553 = vxor.u32 %v552, 2147483648
  %v554 = vmul.f32 %v553, 1.442695
  %v555 = vpow.pop %v554
  %v556 = vadd.f32 %v555, 1.0
  %v557 = vrcp.pop %v556
  %v558 = vmul.f32 %v556, %v557
  %v559 = vsub.f32 1.0, %v558
  %v560 = vmul.f32 %v557, %v559
  %v561 = vadd.f32 %v557, %v560
  %vm562 = vweird.f32 %v556
  %vm563 = vweird.f32 %v557
  %vm564 = vmor %vm562, %vm563
  %v565 = vsel %vm564, %v557, %v561
  %v566 = vand.u32 2147483647, %v556
  %vm567 = vcmp.eq.f32.partialorder %v566, 8.507059e+37
  %v568 = vand.u32 %v556, 2147483648
  %v569 = vor.u32 1.1754944e-38, %v568
  %v570 = vsel %vm567, %v569, %v565
  %v571 = vmul.f32 1.0, %v570
  %v572 = vtanh.pop %v552
  %v573 = vmul.f32 %v571, %v525
  %575 = vrot.lane.b32.xlu0 %v572, 64
  %v576 = vpop.permute.xlu0 %575
  %v578 = vmul.f32 %v571, %v576
  %580 = vrot.lane.b32.xlu0 %v578, 32
  %v581 = vpop.permute.xlu0 %580
  %v583 = vadd.f32 %v573, %v581
  %v584 = vtanh.pop %v583
  %586 = vrot.lane.b32.xlu0 %v584, 64
  %v587 = vpop.permute.xlu0 %586
  %v589 = vmul.f32 %v571, %v587
  %v590 = vpack.c.bf16 %v241, %v183
  %v591 = vpack.c.bf16 %v357, %v299
  %v592 = vpack.c.bf16 %v473, %v415
  %v593 = vpack.c.bf16 %v589, %v531
  %v594 = vld [vmem:[%s4] sm:$0xf]
  %v595 = vld [vmem:[%s4 + $0x4] sm:$0xf]
  %v596 = vld [vmem:[%s4 + $0x8] sm:$0xf]
  %v597 = vld [vmem:[%s4 + $0xc] sm:$0xf]
  %v598 = vld [vmem:[%s5] sm:$0x1]
  %v600 = vperm.slane %v598, 0
  %606 = vrot.lane.b32.xlu0 %v590, 32
  %v607 = vpop.permute.xlu0 %606
  %608 = vrot.lane.b32.xlu0 %v591, 32
  %v609 = vpop.permute.xlu0 %608
  %610 = vrot.lane.b32.xlu0 %v592, 32
  %v611 = vpop.permute.xlu0 %610
  %612 = vrot.lane.b32.xlu0 %v593, 32
  %v613 = vpop.permute.xlu0 %612
  %v618 = vunpack.c.l.b16 %v594
  %v619 = vunpack.c.l.b16 %v595
  %v620 = vunpack.c.l.b16 %v596
  %v621 = vunpack.c.l.b16 %v597
  %v622 = vpack.c.b16 %v619, %v618
  %v623 = vpack.c.b16 %v621, %v620
  %v627 = vsel %vm72, %v607, 0
  %v630 = vsel %vm72, %v609, 0
  %v633 = vsel %vm72, %v611, 0
  %v636 = vsel %vm72, %v613, 0
  %638 = vmatpush.bf16.msra.mxu0 0
  %639 = vmatpush.bf16.msra.mxu0 0
  %640 = vmatpush.bf16.msra.mxu0 0
  %641 = vmatpush.bf16.msra.mxu0 0
  %642 = vmatpush.bf16.msra.mxu0 0
  %643 = vmatpush.bf16.msra.mxu0 0
  %644 = vmatpush.bf16.msra.mxu0 %v623
  %645 = vmatpush.bf16.msra.mxu0 %v622
  %646 = vmatmul.bf16.gmra.mxu0 %v627
  %v647 = vpop.f32.mrf.mxu0
  %v648 = vadd.f32 %v600, %v647
  %v649 = vpop.f32.mrf.mxu0
  %v650 = vadd.f32 %v600, %v649
  %651 = vmatmul.bf16.gmra.mxu0 %v630
  %v652 = vpop.f32.mrf.mxu0
  %v653 = vadd.f32 %v600, %v652
  %v654 = vpop.f32.mrf.mxu0
  %v655 = vadd.f32 %v600, %v654
  %656 = vmatmul.bf16.gmra.mxu0 %v633
  %v657 = vpop.f32.mrf.mxu0
  %v658 = vadd.f32 %v600, %v657
  %v659 = vpop.f32.mrf.mxu0
  %v660 = vadd.f32 %v600, %v659
  %661 = vmatmul.bf16.gmra.mxu0 %v636
  %v662 = vpop.f32.mrf.mxu0
  %v663 = vadd.f32 %v600, %v662
  %v664 = vpop.f32.mrf.mxu0
  %v665 = vadd.f32 %v600, %v664
  %666 = vdwg.mxu0
  %667 = vmax.xlane.f32.xlu0 %v648
  %v668 = vpop.xlane.xlu0 %667
  %669 = vmax.xlane.f32.xlu0 %v650
  %v670 = vpop.xlane.xlu0 %669
  %671 = vmax.xlane.f32.xlu0 %v653
  %v672 = vpop.xlane.xlu0 %671
  %673 = vmax.xlane.f32.xlu0 %v655
  %v674 = vpop.xlane.xlu0 %673
  %675 = vmax.xlane.f32.xlu0 %v658
  %v676 = vpop.xlane.xlu0 %675
  %677 = vmax.xlane.f32.xlu0 %v660
  %v678 = vpop.xlane.xlu0 %677
  %679 = vmax.xlane.f32.xlu0 %v663
  %v680 = vpop.xlane.xlu0 %679
  %681 = vmax.xlane.f32.xlu0 %v665
  %v682 = vpop.xlane.xlu0 %681
  %v683 = vsub.f32 %v648, %v668
  %v684 = vsub.f32 %v650, %v670
  %v685 = vsub.f32 %v653, %v672
  %v686 = vsub.f32 %v655, %v674
  %v687 = vsub.f32 %v658, %v676
  %v688 = vsub.f32 %v660, %v678
  %v689 = vsub.f32 %v663, %v680
  %v690 = vsub.f32 %v665, %v682
  %v691 = vmul.f32 %v683, 1.442695
  %v692 = vpow.pop %v691
  %v693 = vmul.f32 %v684, 1.442695
  %v694 = vpow.pop %v693
  %v695 = vmul.f32 %v685, 1.442695
  %v696 = vpow.pop %v695
  %v697 = vmul.f32 %v686, 1.442695
  %v698 = vpow.pop %v697
  %v699 = vmul.f32 %v687, 1.442695
  %v700 = vpow.pop %v699
  %v701 = vmul.f32 %v688, 1.442695
  %v702 = vpow.pop %v701
  %v703 = vmul.f32 %v689, 1.442695
  %v704 = vpow.pop %v703
  %v705 = vmul.f32 %v690, 1.442695
  %v706 = vpow.pop %v705
  %707 = vadd.xlane.f32.xlu0 %v692
  %v708 = vpop.xlane.xlu0 %707
  %709 = vadd.xlane.f32.xlu0 %v694
  %v710 = vpop.xlane.xlu0 %709
  %711 = vadd.xlane.f32.xlu0 %v696
  %v712 = vpop.xlane.xlu0 %711
  %713 = vadd.xlane.f32.xlu0 %v698
  %v714 = vpop.xlane.xlu0 %713
  %715 = vadd.xlane.f32.xlu0 %v700
  %v716 = vpop.xlane.xlu0 %715
  %717 = vadd.xlane.f32.xlu0 %v702
  %v718 = vpop.xlane.xlu0 %717
  %719 = vadd.xlane.f32.xlu0 %v704
  %v720 = vpop.xlane.xlu0 %719
  %721 = vadd.xlane.f32.xlu0 %v706
  %v722 = vpop.xlane.xlu0 %721
  %v723 = vlog2.pop %v708
  %v724 = vmul.f32 %v723, 0.6931472
  %v725 = vlog2.pop %v710
  %v726 = vmul.f32 %v725, 0.6931472
  %v727 = vlog2.pop %v712
  %v728 = vmul.f32 %v727, 0.6931472
  %v729 = vlog2.pop %v714
  %v730 = vmul.f32 %v729, 0.6931472
  %v731 = vlog2.pop %v716
  %v732 = vmul.f32 %v731, 0.6931472
  %v733 = vlog2.pop %v718
  %v734 = vmul.f32 %v733, 0.6931472
  %v735 = vlog2.pop %v720
  %v736 = vmul.f32 %v735, 0.6931472
  %v737 = vlog2.pop %v722
  %v738 = vmul.f32 %v737, 0.6931472
  %v739 = vsub.f32 %v683, %v724
  %v740 = vsub.f32 %v684, %v726
  %v741 = vsub.f32 %v685, %v728
  %v742 = vsub.f32 %v686, %v730
  %v743 = vsub.f32 %v687, %v732
  %v744 = vsub.f32 %v688, %v734
  %v745 = vsub.f32 %v689, %v736
  %v746 = vsub.f32 %v690, %v738
  %747 = vst [vmem:[%s6] sm:$0xff] %v739
  %748 = vst [vmem:[%s6 + $0x8] sm:$0xff] %v740
  %749 = vst [vmem:[%s6 + $0x10] sm:$0xff] %v741
  %750 = vst [vmem:[%s6 + $0x18] sm:$0xff] %v742
  %751 = vst [vmem:[%s6 + $0x20] sm:$0xff] %v743
  %752 = vst [vmem:[%s6 + $0x28] sm:$0xff] %v744
  %753 = vst [vmem:[%s6 + $0x30] sm:$0xff] %v745
  %754 = vst [vmem:[%s6 + $0x38] sm:$0xff] %v746
  // Predicated region
  $region26: #{model_forward.1} parent=0 // pred_check
    _
  $region27: #{model_forward.1} parent=0 // pred_check_branch
    %756 = sbr.rel (0) target = $region29
  $region28: #{model_forward.1} parent=0 // pred_region
    _
  $region29: #{model_forward.1} parent=0 // pred_fallthru
    _
  // Predicated region
  $region30: #{model_forward.1} parent=0 // pred_check
    _
  $region31: #{model_forward.1} parent=0 // pred_check_branch
    %758 = sbr.rel (0) target = $region33
  $region32: #{model_forward.1} parent=0 // pred_region
    _
  $region33: #{model_forward.1} parent=0 // pred_fallthru
    _

</llo_original>
